<compile_context>
chip_gen: v7x
topology: tpu7x:2x2x1
jax: 0.10.0
libtpu: 0.0.40
codegen_flags: <defaults>
</compile_context>

<pallas_src>
import jax
import jax.numpy as jnp
from jax.experimental import pallas as pl
from jax.experimental.pallas import tpu as pltpu


def _round_up(x, m):
    return ((x + m - 1) // m) * m


# --------------------------------------------------------------------------- #
# Kernels
# --------------------------------------------------------------------------- #
def _encoder_kernel_single_goal(
    obs_ref,
    w1_ref, b1_ref, w2_ref, b2_ref, w3_ref, b3_ref,   # obs MLP encoder
    wf1o_ref, tbias_ref, wf2_ref, bf2_ref,            # fusion net (text folded into tbias)
    out_ref,
):
    """num_goals == 1: text contribution pre-folded into tbias = text@Wf1_txt + bf1."""
    f32 = jnp.float32

    # ObservationEncoder (mlp): Linear->ReLU->Linear->ReLU->Linear.
    # bf16 dot operands, f32 accumulation; adds/ReLU stay f32.
    x = obs_ref[...]                                              # bf16 [TB, obs_dim]
    h = jnp.dot(x, w1_ref[...], preferred_element_type=f32) + b1_ref[...]
    h = jnp.maximum(h, 0.0)
    h = jnp.dot(h.astype(w2_ref.dtype), w2_ref[...],
                preferred_element_type=f32) + b2_ref[...]
    h = jnp.maximum(h, 0.0)
    z = jnp.dot(h.astype(w3_ref.dtype), w3_ref[...],
                preferred_element_type=f32) + b3_ref[...]         # [TB, latent_pad]

    # fusion layer 1: obs_lat @ Wf1[:L]  +  (text @ Wf1[L:] + bf1)  [hoisted row]
    f = (jnp.dot(z.astype(wf1o_ref.dtype), wf1o_ref[...],
                 preferred_element_type=f32)
         + tbias_ref[...])
    f = jnp.maximum(f, 0.0)

    # fusion layer 2 (no activation, matches nn.Sequential)
    out = jnp.dot(f.astype(wf2_ref.dtype), wf2_ref[...],
                  preferred_element_type=f32) + bf2_ref[...]
    out_ref[...] = out.astype(out_ref.dtype)


def _encoder_kernel_per_row_text(
    obs_ref, txt_ref,
    w1_ref, b1_ref, w2_ref, b2_ref, w3_ref, b3_ref,
    wf1o_ref, wf1t_ref, bf1_ref, wf2_ref, bf2_ref,
    out_ref,
):
    """num_goals == batch: per-row text, exact two-dot concat decomposition."""
    f32 = jnp.float32

    x = obs_ref[...]
    h = jnp.dot(x, w1_ref[...], preferred_element_type=f32) + b1_ref[...]
    h = jnp.maximum(h, 0.0)
    h = jnp.dot(h.astype(w2_ref.dtype), w2_ref[...],
                preferred_element_type=f32) + b2_ref[...]
    h = jnp.maximum(h, 0.0)
    z = jnp.dot(h.astype(w3_ref.dtype), w3_ref[...],
                preferred_element_type=f32) + b3_ref[...]

    txt_part = jnp.dot(txt_ref[...], wf1t_ref[...],
                       preferred_element_type=f32)                # [TB, fusion]
    f = (jnp.dot(z.astype(wf1o_ref.dtype), wf1o_ref[...],
                 preferred_element_type=f32)
         + txt_part + bf1_ref[...])
    f = jnp.maximum(f, 0.0)

    out = jnp.dot(f.astype(wf2_ref.dtype), wf2_ref[...],
                  preferred_element_type=f32) + bf2_ref[...]
    out_ref[...] = out.astype(out_ref.dtype)


# --------------------------------------------------------------------------- #
# Wrapper
# --------------------------------------------------------------------------- #
def multimodal_encoder_forward(obs, text_emb, params, *, block_rows=1024,
                               out_dtype=jnp.float32):
    """obs: [B, obs_dim] f32, text_emb: [num_goals, emb_dim] f32 (num_goals in {1, B}).

    Returns joint encoding [B, fusion_dim] (f32 by default; pass
    out_dtype=jnp.bfloat16 to halve writeback traffic if downstream accepts it).
    """
    B, obs_dim = obs.shape
    T, emb_dim = text_emb.shape
    if T not in (1, B):
        # matches PyTorch .expand() semantics, which only replicates a size-1 dim
        raise ValueError(f"num_goals ({T}) must be 1 or equal to batch ({B})")

    hidden_dim = params["w1"].shape[1]
    latent_dim = params["w3"].shape[1]
    fusion_dim = params["wf2"].shape[1]
    wdt = params["w1"].dtype                     # bf16 weight storage
    f32 = jnp.float32

    # ---- lane-pad hidden/latent dims to 128 (zeros are exact through ReLU) --
    hid_p = _round_up(hidden_dim, 128)
    lat_p = _round_up(latent_dim, 128)

    def pad_cols(a, n):
        return a if a.shape[1] == n else jnp.pad(a, ((0, 0), (0, n - a.shape[1])))

    def pad_rows(a, n):
        return a if a.shape[0] == n else jnp.pad(a, ((0, n - a.shape[0]), (0, 0)))

    w1 = pad_cols(params["w1"], hid_p)
    b1 = pad_cols(params["b1"], hid_p)
    w2 = pad_rows(pad_cols(params["w2"], hid_p), hid_p)
    b2 = pad_cols(params["b2"], hid_p)
    w3 = pad_rows(pad_cols(params["w3"], lat_p), hid_p)
    b3 = pad_cols(params["b3"], lat_p)
    # Split Wf1 into obs-latent / text row blocks (static slices, done once).
    wf1_obs = pad_rows(params["wf1"][:latent_dim], lat_p)
    wf1_txt = params["wf1"][latent_dim:]

    # ---- batch tiling ---------------------------------------------------- #
    # 16-row alignment (bf16 native (16,128) tiling); big tiles amortize the
    # ~0.35us per-grid-step overhead. Per-tile VMEM even at TB=1024 is only a
    # couple MB (nowhere near v7x's 64 MiB / v5e-v6e's 128 MiB).  Ensure >= 2
    # grid steps when possible so v7x's two TensorCores both get work.
    B_pad = _round_up(B, 16)
    tb = min(block_rows, B_pad)
    if B_pad >= 32 and B_pad // tb < 2:
        tb = B_pad // 2
    tb = max(16, (tb // 16) * 16)
    B_pad = _round_up(B_pad, tb)
    grid = (B_pad // tb,)

    obs_p = obs.astype(wdt)
    if B_pad != B:
        obs_p = jnp.pad(obs_p, ((0, B_pad - B), (0, 0)))

    def const(arr):
        # weights/biases: full-array block, constant index -> VMEM-resident
        return pl.BlockSpec(arr.shape, lambda i: (0, 0))

    obs_spec = pl.BlockSpec((tb, obs_dim), lambda i: (i, 0))
    out_spec = pl.BlockSpec((tb, fusion_dim), lambda i: (i, 0))

    single_goal = (T == 1)
    if single_goal:
        # Hoist the grid-invariant text matmul: one tiny f32 matmul in the
        # wrapper replaces a per-step [1,emb]x[emb,fusion] dot + the ~96KB
        # wf1_txt weight residency inside the kernel.  f32 math matches the
        # kernel's bf16-operand / f32-accumulate semantics for this row.
        tbias = (jnp.dot(text_emb.astype(wdt).astype(f32), wf1_txt.astype(f32))
                 + params["bf1"].astype(f32))                   # [1, fusion_dim]
        kernel = _encoder_kernel_single_goal
        args = (obs_p, w1, b1, w2, b2, w3, b3, wf1_obs, tbias,
                params["wf2"], params["bf2"])
        in_specs = [obs_spec,
                    const(w1), const(b1), const(w2), const(b2),
                    const(w3), const(b3),
                    const(wf1_obs), const(tbias),
                    const(params["wf2"]), const(params["bf2"])]
    else:
        txt_p = text_emb.astype(wdt)
        if B_pad != B:
            txt_p = jnp.pad(txt_p, ((0, B_pad - B), (0, 0)))
        kernel = _encoder_kernel_per_row_text
        args = (obs_p, txt_p, w1, b1, w2, b2, w3, b3,
                wf1_obs, wf1_txt, params["bf1"], params["wf2"], params["bf2"])
        in_specs = [obs_spec,
                    pl.BlockSpec((tb, emb_dim), lambda i: (i, 0)),
                    const(w1), const(b1), const(w2), const(b2),
                    const(w3), const(b3),
                    const(wf1_obs), const(wf1_txt), const(params["bf1"]),
                    const(params["wf2"]), const(params["bf2"])]

    # ---- advisory cost estimate so XLA can overlap this small call -------- #
    flops = 2 * B_pad * (obs_dim * hid_p + hid_p * hid_p + hid_p * lat_p
                         + lat_p * fusion_dim + fusion_dim * fusion_dim)
    weight_bytes = sum(int(a.size) * a.dtype.itemsize
                       for a in args if a is not obs_p)
    bytes_accessed = (int(obs_p.size) * obs_p.dtype.itemsize
                      + B_pad * fusion_dim * jnp.dtype(out_dtype).itemsize
                      + weight_bytes)
    cost = pl.CostEstimate(flops=int(flops), transcendentals=0,
                           bytes_accessed=int(bytes_accessed))

    out = pl.pallas_call(
        kernel,
        out_shape=jax.ShapeDtypeStruct((B_pad, fusion_dim), out_dtype),
        grid=grid,
        in_specs=in_specs,
        out_specs=out_spec,
        compiler_params=pltpu.CompilerParams(
            dimension_semantics=("parallel",),   # v7x: shard batch over both TCs
        ),
        cost_estimate=cost,
    )(*args)
    return out[:B]


# --------------------------------------------------------------------------- #
# Params & reference
# --------------------------------------------------------------------------- #
def init_params(key, obs_dim, hidden_dim, latent_dim, emb_dim, fusion_dim,
                weight_dtype=jnp.bfloat16):
    """Deterministic synthetic weights. Linear weights stored [in, out], bf16;
    biases f32 (added in f32 inside the kernel)."""
    ks = jax.random.split(key, 5)

    def lin(k, fan_in, fan_out):
        bound = float(fan_in) ** -0.5
        kw, kb = jax.random.split(k)
        w = jax.random.uniform(kw, (fan_in, fan_out), jnp.float32, -bound, bound)
        b = jax.random.uniform(kb, (1, fan_out), jnp.float32, -bound, bound)
        return w.astype(weight_dtype), b

    w1, b1 = lin(ks[0], obs_dim, hidden_dim)
    w2, b2 = lin(ks[1], hidden_dim, hidden_dim)
    w3, b3 = lin(ks[2], hidden_dim, latent_dim)
    total_dim = latent_dim + emb_dim
    wf1, bf1 = lin(ks[3], total_dim, fusion_dim)
    wf2, bf2 = lin(ks[4], fusion_dim, fusion_dim)
    return dict(w1=w1, b1=b1, w2=w2, b2=b2, w3=w3, b3=b3,
                wf1=wf1, bf1=bf1, wf2=wf2, bf2=bf2)


def reference_forward(obs, text_emb, params):
    """Pure-JAX reference mirroring the PyTorch forward and the kernel's
    bf16-operand / f32-accumulation matmul precision."""
    B = obs.shape[0]
    wdt = params["w1"].dtype
    f32 = jnp.float32

    def mm(a, w):  # bf16 operands, f32 accumulation
        return jnp.dot(a.astype(wdt).astype(f32), w.astype(f32))

    if text_emb.shape[0] != B:
        text_emb = jnp.broadcast_to(text_emb, (B, text_emb.shape[1]))

    h = jnp.maximum(mm(obs, params["w1"]) + params["b1"], 0.0)
    h = jnp.maximum(mm(h, params["w2"]) + params["b2"], 0.0)
    z = mm(h, params["w3"]) + params["b3"]

    latent_dim = params["w3"].shape[1]
    f = (mm(z, params["wf1"][:latent_dim])
         + mm(text_emb, params["wf1"][latent_dim:])
         + params["bf1"])
    f = jnp.maximum(f, 0.0)
    return mm(f, params["wf2"]) + params["bf2"]


if __name__ == "__main__":
    # Small shapes consistent with the module (mlp obs encoder + SBERT-style text emb).
    batch, obs_dim, hidden_dim, latent_dim = 2, 32, 64, 32
    emb_dim, fusion_dim = 384, 128  # all-MiniLM-L6-v2 -> 384-dim embeddings

    key = jax.random.PRNGKey(0)
    k_obs, k_txt, k_par = jax.random.split(key, 3)

    obs = jax.random.normal(k_obs, (batch, obs_dim), jnp.float32)
    # single-goal text: shape [1, emb_dim]; its fusion contribution is hoisted.
    # TODO(synk): actual CLIP/SBERT text encoding is an external pretrained
    #             transformer; the embedding is synthesized deterministically here.
    text_emb = jax.random.normal(k_txt, (1, emb_dim), jnp.float32)

    params = init_params(k_par, obs_dim, hidden_dim, latent_dim, emb_dim, fusion_dim)

    # num_goals == 1 path (hoisted text contribution)
    out = multimodal_encoder_forward(obs, text_emb, params)
    out = jax.block_until_ready(out)
    ref = reference_forward(obs, text_emb, params)
    assert out.shape == (batch, fusion_dim)
    assert jnp.allclose(out, ref, atol=1e-2, rtol=1e-2), "mismatch vs reference (T==1)"

    # num_goals == batch path (per-row text, in-kernel two-dot decomposition)
    text_emb_b = jax.random.normal(k_txt, (batch, emb_dim), jnp.float32)
    out_b = jax.block_until_ready(
        multimodal_encoder_forward(obs, text_emb_b, params))
    ref_b = reference_forward(obs, text_emb_b, params)
    assert jnp.allclose(out_b, ref_b, atol=1e-2, rtol=1e-2), "mismatch vs reference (T==B)"

    print("KERNEL_OK")
</pallas_src>

<mosaic_0001>
module attributes {stable_mosaic.version = 11 : i64} {
  func.func @_encoder_kernel_single_goal(%arg0: i32, %arg1: memref<16x32xbf16, #tpu.memory_space<vmem>>, %arg2: memref<32x128xbf16, #tpu.memory_space<vmem>>, %arg3: memref<1x128xf32, #tpu.memory_space<vmem>>, %arg4: memref<128x128xbf16, #tpu.memory_space<vmem>>, %arg5: memref<1x128xf32, #tpu.memory_space<vmem>>, %arg6: memref<128x128xbf16, #tpu.memory_space<vmem>>, %arg7: memref<1x128xf32, #tpu.memory_space<vmem>>, %arg8: memref<128x128xbf16, #tpu.memory_space<vmem>>, %arg9: memref<1x128xf32, #tpu.memory_space<vmem>>, %arg10: memref<128x128xbf16, #tpu.memory_space<vmem>>, %arg11: memref<1x128xf32, #tpu.memory_space<vmem>>, %arg12: memref<16x128xf32, #tpu.memory_space<vmem>>) attributes {dimension_semantics = [#tpu.dimension_semantics<parallel>], iteration_bounds = array<i64: 1>, scalar_prefetch = 0 : i64, scratch_operands = 0 : i64, tpu.core_type = #tpu.core_type<tc>, window_params = [{transform_indices = @transform_0, window_bounds = array<i64: 16, 32>}, {pipeline_mode = #tpu.pipeline_mode<synchronous>, transform_indices = @transform_1, window_bounds = array<i64: 32, 128>}, {pipeline_mode = #tpu.pipeline_mode<synchronous>, transform_indices = @transform_2, window_bounds = array<i64: 1, 128>}, {pipeline_mode = #tpu.pipeline_mode<synchronous>, transform_indices = @transform_3, window_bounds = array<i64: 128, 128>}, {pipeline_mode = #tpu.pipeline_mode<synchronous>, transform_indices = @transform_4, window_bounds = array<i64: 1, 128>}, {pipeline_mode = #tpu.pipeline_mode<synchronous>, transform_indices = @transform_5, window_bounds = array<i64: 128, 128>}, {pipeline_mode = #tpu.pipeline_mode<synchronous>, transform_indices = @transform_6, window_bounds = array<i64: 1, 128>}, {pipeline_mode = #tpu.pipeline_mode<synchronous>, transform_indices = @transform_7, window_bounds = array<i64: 128, 128>}, {pipeline_mode = #tpu.pipeline_mode<synchronous>, transform_indices = @transform_8, window_bounds = array<i64: 1, 128>}, {pipeline_mode = #tpu.pipeline_mode<synchronous>, transform_indices = @transform_9, window_bounds = array<i64: 128, 128>}, {pipeline_mode = #tpu.pipeline_mode<synchronous>, transform_indices = @transform_10, window_bounds = array<i64: 1, 128>}, {transform_indices = @transform_11, window_bounds = array<i64: 16, 128>}]} {
    %c0 = arith.constant 0 : index
    %c0_0 = arith.constant 0 : index
    %0 = vector.load %arg1[%c0, %c0_0] : memref<16x32xbf16, #tpu.memory_space<vmem>>, vector<16x32xbf16>
    %c0_1 = arith.constant 0 : index
    %c0_2 = arith.constant 0 : index
    %1 = vector.load %arg2[%c0_1, %c0_2] : memref<32x128xbf16, #tpu.memory_space<vmem>>, vector<32x128xbf16>
    %cst = arith.constant dense<0.000000e+00> : vector<16x128xf32>
    %2 = tpu.matmul %0, %1, %cst {dimension_numbers = #tpu.dot_dimension_numbers<[1], [0], [0], [1], [0, 0, 1, 1], [], []>} : vector<16x32xbf16>, vector<32x128xbf16>, vector<16x128xf32> -> vector<16x128xf32>
    %c0_3 = arith.constant 0 : index
    %c0_4 = arith.constant 0 : index
    %3 = vector.load %arg3[%c0_3, %c0_4] : memref<1x128xf32, #tpu.memory_space<vmem>>, vector<1x128xf32>
    %4 = vector.broadcast %3 : vector<1x128xf32> to vector<16x128xf32>
    %5 = arith.addf %2, %4 : vector<16x128xf32>
    %cst_5 = arith.constant 0.000000e+00 : f32
    %6 = vector.broadcast %cst_5 : f32 to vector<16x128xf32>
    %7 = arith.maximumf %5, %6 : vector<16x128xf32>
    %8 = arith.truncf %7 : vector<16x128xf32> to vector<16x128xbf16>
    %c0_6 = arith.constant 0 : index
    %c0_7 = arith.constant 0 : index
    %9 = vector.load %arg4[%c0_6, %c0_7] : memref<128x128xbf16, #tpu.memory_space<vmem>>, vector<128x128xbf16>
    %cst_8 = arith.constant dense<0.000000e+00> : vector<16x128xf32>
    %10 = tpu.matmul %8, %9, %cst_8 {dimension_numbers = #tpu.dot_dimension_numbers<[1], [0], [0], [1], [0, 0, 1, 1], [], []>} : vector<16x128xbf16>, vector<128x128xbf16>, vector<16x128xf32> -> vector<16x128xf32>
    %c0_9 = arith.constant 0 : index
    %c0_10 = arith.constant 0 : index
    %11 = vector.load %arg5[%c0_9, %c0_10] : memref<1x128xf32, #tpu.memory_space<vmem>>, vector<1x128xf32>
    %12 = vector.broadcast %11 : vector<1x128xf32> to vector<16x128xf32>
    %13 = arith.addf %10, %12 : vector<16x128xf32>
    %cst_11 = arith.constant 0.000000e+00 : f32
    %14 = vector.broadcast %cst_11 : f32 to vector<16x128xf32>
    %15 = arith.maximumf %13, %14 : vector<16x128xf32>
    %16 = arith.truncf %15 : vector<16x128xf32> to vector<16x128xbf16>
    %c0_12 = arith.constant 0 : index
    %c0_13 = arith.constant 0 : index
    %17 = vector.load %arg6[%c0_12, %c0_13] : memref<128x128xbf16, #tpu.memory_space<vmem>>, vector<128x128xbf16>
    %cst_14 = arith.constant dense<0.000000e+00> : vector<16x128xf32>
    %18 = tpu.matmul %16, %17, %cst_14 {dimension_numbers = #tpu.dot_dimension_numbers<[1], [0], [0], [1], [0, 0, 1, 1], [], []>} : vector<16x128xbf16>, vector<128x128xbf16>, vector<16x128xf32> -> vector<16x128xf32>
    %c0_15 = arith.constant 0 : index
    %c0_16 = arith.constant 0 : index
    %19 = vector.load %arg7[%c0_15, %c0_16] : memref<1x128xf32, #tpu.memory_space<vmem>>, vector<1x128xf32>
    %20 = vector.broadcast %19 : vector<1x128xf32> to vector<16x128xf32>
    %21 = arith.addf %18, %20 : vector<16x128xf32>
    %22 = arith.truncf %21 : vector<16x128xf32> to vector<16x128xbf16>
    %c0_17 = arith.constant 0 : index
    %c0_18 = arith.constant 0 : index
    %23 = vector.load %arg8[%c0_17, %c0_18] : memref<128x128xbf16, #tpu.memory_space<vmem>>, vector<128x128xbf16>
    %cst_19 = arith.constant dense<0.000000e+00> : vector<16x128xf32>
    %24 = tpu.matmul %22, %23, %cst_19 {dimension_numbers = #tpu.dot_dimension_numbers<[1], [0], [0], [1], [0, 0, 1, 1], [], []>} : vector<16x128xbf16>, vector<128x128xbf16>, vector<16x128xf32> -> vector<16x128xf32>
    %c0_20 = arith.constant 0 : index
    %c0_21 = arith.constant 0 : index
    %25 = vector.load %arg9[%c0_20, %c0_21] : memref<1x128xf32, #tpu.memory_space<vmem>>, vector<1x128xf32>
    %26 = vector.broadcast %25 : vector<1x128xf32> to vector<16x128xf32>
    %27 = arith.addf %24, %26 : vector<16x128xf32>
    %cst_22 = arith.constant 0.000000e+00 : f32
    %28 = vector.broadcast %cst_22 : f32 to vector<16x128xf32>
    %29 = arith.maximumf %27, %28 : vector<16x128xf32>
    %30 = arith.truncf %29 : vector<16x128xf32> to vector<16x128xbf16>
    %c0_23 = arith.constant 0 : index
    %c0_24 = arith.constant 0 : index
    %31 = vector.load %arg10[%c0_23, %c0_24] : memref<128x128xbf16, #tpu.memory_space<vmem>>, vector<128x128xbf16>
    %cst_25 = arith.constant dense<0.000000e+00> : vector<16x128xf32>
    %32 = tpu.matmul %30, %31, %cst_25 {dimension_numbers = #tpu.dot_dimension_numbers<[1], [0], [0], [1], [0, 0, 1, 1], [], []>} : vector<16x128xbf16>, vector<128x128xbf16>, vector<16x128xf32> -> vector<16x128xf32>
    %c0_26 = arith.constant 0 : index
    %c0_27 = arith.constant 0 : index
    %33 = vector.load %arg11[%c0_26, %c0_27] : memref<1x128xf32, #tpu.memory_space<vmem>>, vector<1x128xf32>
    %34 = vector.broadcast %33 : vector<1x128xf32> to vector<16x128xf32>
    %35 = arith.addf %32, %34 : vector<16x128xf32>
    %c0_28 = arith.constant 0 : index
    %c0_29 = arith.constant 0 : index
    %36 = vector.load %arg12[%c0_28, %c0_29] : memref<16x128xf32, #tpu.memory_space<vmem>>, vector<16x128xf32>
    tpu.vector_store %arg12[%c0_28, %c0_29], %35 {strides = array<i32>} : memref<16x128xf32, #tpu.memory_space<vmem>>, vector<16x128xf32>,
    return
  }
  func.func @transform_0(%arg0: i32) -> (i32, i32) {
    %c0_i32 = arith.constant 0 : i32
    %c0_i32_0 = arith.constant 0 : i32
    return %arg0, %c0_i32 : i32, i32
  }
  func.func @transform_1(%arg0: i32) -> (i32, i32) {
    %c0_i32 = arith.constant 0 : i32
    %c0_i32_0 = arith.constant 0 : i32
    %c0_i32_1 = arith.constant 0 : i32
    return %c0_i32, %c0_i32_0 : i32, i32
  }
  func.func @transform_2(%arg0: i32) -> (i32, i32) {
    %c0_i32 = arith.constant 0 : i32
    %c0_i32_0 = arith.constant 0 : i32
    %c0_i32_1 = arith.constant 0 : i32
    return %c0_i32, %c0_i32_0 : i32, i32
  }
  func.func @transform_3(%arg0: i32) -> (i32, i32) {
    %c0_i32 = arith.constant 0 : i32
    %c0_i32_0 = arith.constant 0 : i32
    %c0_i32_1 = arith.constant 0 : i32
    return %c0_i32, %c0_i32_0 : i32, i32
  }
  func.func @transform_4(%arg0: i32) -> (i32, i32) {
    %c0_i32 = arith.constant 0 : i32
    %c0_i32_0 = arith.constant 0 : i32
    %c0_i32_1 = arith.constant 0 : i32
    return %c0_i32, %c0_i32_0 : i32, i32
  }
  func.func @transform_5(%arg0: i32) -> (i32, i32) {
    %c0_i32 = arith.constant 0 : i32
    %c0_i32_0 = arith.constant 0 : i32
    %c0_i32_1 = arith.constant 0 : i32
    return %c0_i32, %c0_i32_0 : i32, i32
  }
  func.func @transform_6(%arg0: i32) -> (i32, i32) {
    %c0_i32 = arith.constant 0 : i32
    %c0_i32_0 = arith.constant 0 : i32
    %c0_i32_1 = arith.constant 0 : i32
    return %c0_i32, %c0_i32_0 : i32, i32
  }
  func.func @transform_7(%arg0: i32) -> (i32, i32) {
    %c0_i32 = arith.constant 0 : i32
    %c0_i32_0 = arith.constant 0 : i32
    %c0_i32_1 = arith.constant 0 : i32
    return %c0_i32, %c0_i32_0 : i32, i32
  }
  func.func @transform_8(%arg0: i32) -> (i32, i32) {
    %c0_i32 = arith.constant 0 : i32
    %c0_i32_0 = arith.constant 0 : i32
    %c0_i32_1 = arith.constant 0 : i32
    return %c0_i32, %c0_i32_0 : i32, i32
  }
  func.func @transform_9(%arg0: i32) -> (i32, i32) {
    %c0_i32 = arith.constant 0 : i32
    %c0_i32_0 = arith.constant 0 : i32
    %c0_i32_1 = arith.constant 0 : i32
    return %c0_i32, %c0_i32_0 : i32, i32
  }
  func.func @transform_10(%arg0: i32) -> (i32, i32) {
    %c0_i32 = arith.constant 0 : i32
    %c0_i32_0 = arith.constant 0 : i32
    %c0_i32_1 = arith.constant 0 : i32
    return %c0_i32, %c0_i32_0 : i32, i32
  }
  func.func @transform_11(%arg0: i32) -> (i32, i32) {
    %c0_i32 = arith.constant 0 : i32
    %c0_i32_0 = arith.constant 0 : i32
    return %arg0, %c0_i32 : i32, i32
  }
}

</mosaic_0001>

<llo_original>
// kernel: tpu_custom_call.1
$region0: #{tpu_custom_call.1}
  #allocation0 [shape = 'u32[]', space=smem, size = 0x4, offset = 0x4, fixed_abs, tag = 'smem constant byte address 0x4 - core index']
  #allocation1 [shape = 'u32[144,128]{1,0:T(1,128)}', space=vmem, size = 0x12000, scoped, tag = 'internal scratch']
  %s0 = inlined_call_operand.hbm [shape: bf16[16,32], index: 0, kind: input, shape index: {}]
  %s1 = inlined_call_operand.hbm [shape: bf16[32,128], index: 1, kind: input, shape index: {}]
  %s2 = inlined_call_operand.vmem [shape: f32[1,128], index: 2, kind: input, shape index: {}]
  %s3 = inlined_call_operand.hbm [shape: bf16[128,128], index: 3, kind: input, shape index: {}]
  %s4 = inlined_call_operand.vmem [shape: f32[1,128], index: 4, kind: input, shape index: {}]
  %s5 = inlined_call_operand.hbm [shape: bf16[128,128], index: 5, kind: input, shape index: {}]
  %s6 = inlined_call_operand.vmem [shape: f32[1,128], index: 6, kind: input, shape index: {}]
  %s7 = inlined_call_operand.hbm [shape: bf16[128,128], index: 7, kind: input, shape index: {}]
  %s8 = inlined_call_operand.vmem [shape: f32[1,128], index: 8, kind: input, shape index: {}]
  %s9 = inlined_call_operand.hbm [shape: bf16[128,128], index: 9, kind: input, shape index: {}]
  %s10 = inlined_call_operand.vmem [shape: f32[1,128], index: 10, kind: input, shape index: {}]
  %s11 = inlined_call_operand.hbm [shape: f32[16,128], index: 11, kind: output, shape index: {}]
  %s12 = sld [smem:[#allocation0]]
  $region78: #{tpu_custom_call.1} parent=0
    _
  %s14 = ssub.s32 1, %s12
  %s15 = scalar_select 0, %s14, %s12
  $region1: #{tpu_custom_call.1} parent=0
    #allocation2 [shape = 'u8[4096]{0}', space=vmem, size = 0x1000, scoped, tag = 'input window, operand 0, single buffered']
    #allocation3 [shape = 's32[1]{0}', space=sflag, size = 0x4, scoped, tag = 'scoped memory for tpu_custom_call.1']
    #allocation4 [shape = 's32[1]{0}', space=sflag, size = 0x4, scoped, tag = 'scoped memory for tpu_custom_call.1']
    #allocation5 [shape = 'u8[8192]{0}', space=vmem, size = 0x2000, scoped, tag = 'input window, operand 1, single buffered']
    #allocation6 [shape = 's32[1]{0}', space=sflag, size = 0x4, scoped, tag = 'scoped memory for tpu_custom_call.1']
    #allocation7 [shape = 'u8[32768]{0}', space=vmem, size = 0x8000, scoped, tag = 'input window, operand 3, single buffered']
    #allocation8 [shape = 'u8[32768]{0}', space=vmem, size = 0x8000, scoped, tag = 'input window, operand 5, single buffered']
    #allocation9 [shape = 's32[1]{0}', space=sflag, size = 0x4, scoped, tag = 'scoped memory for tpu_custom_call.1']
    #allocation10 [shape = 'u8[32768]{0}', space=vmem, size = 0x8000, scoped, tag = 'input window, operand 7, single buffered']
    #allocation11 [shape = 'u8[32768]{0}', space=vmem, size = 0x8000, scoped, tag = 'input window, operand 9, single buffered']
    #allocation12 [shape = 's32[1]{0}', space=sflag, size = 0x4, scoped, tag = 'scoped memory for tpu_custom_call.1']
    #allocation13 [shape = 'u8[8192]{0}', space=vmem, size = 0x2000, scoped, tag = 'output window, operand 0, single buffered']
    %16 = vsyncpa [#allocation3], 0
    %17 = vsyncpa [#allocation6], 0
    %18 = vsyncpa [#allocation9], 0
    %19 = vsyncpa [#allocation12], 0
    %20 = vsyncpa [#allocation4], 0
    // Predicated region
    $region2: #{tpu_custom_call.1} parent=1 // pred_check
      _
    $region3: #{tpu_custom_call.1} parent=1 // pred_check_branch
      %22 = sbr.rel (0) target = $region5
    $region4: #{tpu_custom_call.1} parent=1 // pred_region
      %s24 = ssub.s32 128, 128
      %25 = vsyncadd [#allocation3], %s24
      %s26 = sshll.u32 [#allocation2], 4
      %s27 = int_to_ptr.vmem [resolvable:$true] %s26
      %32 = dma.hbm_to_vmem [thread:$0]  %s0, 128, %s27, [#allocation3], 64, 64, 4
    $region5: #{tpu_custom_call.1} parent=1 // pred_fallthru
      _
    // Predicated region
    $region6: #{tpu_custom_call.1} parent=1 // pred_check
      _
    $region7: #{tpu_custom_call.1} parent=1 // pred_check_branch
      %34 = sbr.rel (0) target = $region9
    $region8: #{tpu_custom_call.1} parent=1 // pred_region
      %s36 = ssub.s32 256, 256
      %37 = vsyncadd [#allocation6], %s36
      %s38 = sshll.u32 [#allocation5], 4
      %s39 = int_to_ptr.vmem [resolvable:$true] %s38
      %44 = dma.hbm_to_vmem [thread:$0]  %s1, 256, %s39, [#allocation6], 64, 64, 4
    $region9: #{tpu_custom_call.1} parent=1 // pred_fallthru
      _
    // Predicated region
    $region10: #{tpu_custom_call.1} parent=1 // pred_check
      _
    $region11: #{tpu_custom_call.1} parent=1 // pred_check_branch
      %46 = sbr.rel (0) target = $region13
    $region12: #{tpu_custom_call.1} parent=1 // pred_region
      _
    $region13: #{tpu_custom_call.1} parent=1 // pred_fallthru
      _
    // Predicated region
    $region14: #{tpu_custom_call.1} parent=1 // pred_check
      _
    $region15: #{tpu_custom_call.1} parent=1 // pred_check_branch
      %48 = sbr.rel (0) target = $region17
    $region16: #{tpu_custom_call.1} parent=1 // pred_region
      %s50 = ssub.s32 1024, 1024
      %51 = vsyncadd [#allocation6], %s50
      %s52 = sshll.u32 [#allocation7], 4
      %s53 = int_to_ptr.vmem [resolvable:$true] %s52
      %58 = dma.hbm_to_vmem [thread:$0]  %s3, 1024, %s53, [#allocation6], 64, 64, 4
    $region17: #{tpu_custom_call.1} parent=1 // pred_fallthru
      _
    // Predicated region
    $region18: #{tpu_custom_call.1} parent=1 // pred_check
      _
    $region19: #{tpu_custom_call.1} parent=1 // pred_check_branch
      %60 = sbr.rel (0) target = $region21
    $region20: #{tpu_custom_call.1} parent=1 // pred_region
      _
    $region21: #{tpu_custom_call.1} parent=1 // pred_fallthru
      _
    // Predicated region
    $region22: #{tpu_custom_call.1} parent=1 // pred_check
      _
    $region23: #{tpu_custom_call.1} parent=1 // pred_check_branch
      %62 = sbr.rel (0) target = $region25
    $region24: #{tpu_custom_call.1} parent=1 // pred_region
      %s64 = ssub.s32 1024, 1024
      %65 = vsyncadd [#allocation9], %s64
      %s66 = sshll.u32 [#allocation8], 4
      %s67 = int_to_ptr.vmem [resolvable:$true] %s66
      %72 = dma.hbm_to_vmem [thread:$0]  %s5, 1024, %s67, [#allocation9], 64, 64, 4
    $region25: #{tpu_custom_call.1} parent=1 // pred_fallthru
      _
    // Predicated region
    $region26: #{tpu_custom_call.1} parent=1 // pred_check
      _
    $region27: #{tpu_custom_call.1} parent=1 // pred_check_branch
      %74 = sbr.rel (0) target = $region29
    $region28: #{tpu_custom_call.1} parent=1 // pred_region
      _
    $region29: #{tpu_custom_call.1} parent=1 // pred_fallthru
      _
    // Predicated region
    $region30: #{tpu_custom_call.1} parent=1 // pred_check
      _
    $region31: #{tpu_custom_call.1} parent=1 // pred_check_branch
      %76 = sbr.rel (0) target = $region33
    $region32: #{tpu_custom_call.1} parent=1 // pred_region
      %s78 = ssub.s32 1024, 1024
      %79 = vsyncadd [#allocation9], %s78
      %s80 = sshll.u32 [#allocation10], 4
      %s81 = int_to_ptr.vmem [resolvable:$true] %s80
      %86 = dma.hbm_to_vmem [thread:$0]  %s7, 1024, %s81, [#allocation9], 64, 64, 4
    $region33: #{tpu_custom_call.1} parent=1 // pred_fallthru
      _
    // Predicated region
    $region34: #{tpu_custom_call.1} parent=1 // pred_check
      _
    $region35: #{tpu_custom_call.1} parent=1 // pred_check_branch
      %88 = sbr.rel (0) target = $region37
    $region36: #{tpu_custom_call.1} parent=1 // pred_region
      _
    $region37: #{tpu_custom_call.1} parent=1 // pred_fallthru
      _
    // Predicated region
    $region38: #{tpu_custom_call.1} parent=1 // pred_check
      _
    $region39: #{tpu_custom_call.1} parent=1 // pred_check_branch
      %90 = sbr.rel (0) target = $region41
    $region40: #{tpu_custom_call.1} parent=1 // pred_region
      %s92 = ssub.s32 1024, 1024
      %93 = vsyncadd [#allocation12], %s92
      %s94 = sshll.u32 [#allocation11], 4
      %s95 = int_to_ptr.vmem [resolvable:$true] %s94
      %100 = dma.hbm_to_vmem [thread:$0]  %s9, 1024, %s95, [#allocation12], 64, 64, 4
    $region41: #{tpu_custom_call.1} parent=1 // pred_fallthru
      _
    // Predicated region
    $region42: #{tpu_custom_call.1} parent=1 // pred_check
      _
    $region43: #{tpu_custom_call.1} parent=1 // pred_check_branch
      %102 = sbr.rel (0) target = $region45
    $region44: #{tpu_custom_call.1} parent=1 // pred_region
      _
    $region45: #{tpu_custom_call.1} parent=1 // pred_fallthru
      _
    // Predicated region
    $region46: #{tpu_custom_call.1} parent=1 // pred_check
      _
    $region47: #{tpu_custom_call.1} parent=1 // pred_check_branch
      %104 = sbr.rel (0) target = $region49
    $region48: #{tpu_custom_call.1} parent=1 // pred_region
      %105 = dma.done [#allocation3], 128
    $region49: #{tpu_custom_call.1} parent=1 // pred_fallthru
      _
    // Predicated region
    $region50: #{tpu_custom_call.1} parent=1 // pred_check
      _
    $region51: #{tpu_custom_call.1} parent=1 // pred_check_branch
      %107 = sbr.rel (0) target = $region53
    $region52: #{tpu_custom_call.1} parent=1 // pred_region
      %108 = dma.done [#allocation6], 256
    $region53: #{tpu_custom_call.1} parent=1 // pred_fallthru
      _
    // Predicated region
    $region54: #{tpu_custom_call.1} parent=1 // pred_check
      _
    $region55: #{tpu_custom_call.1} parent=1 // pred_check_branch
      %110 = sbr.rel (0) target = $region57
    $region56: #{tpu_custom_call.1} parent=1 // pred_region
      %111 = dma.done [#allocation6], 1024
    $region57: #{tpu_custom_call.1} parent=1 // pred_fallthru
      _
    // Predicated region
    $region58: #{tpu_custom_call.1} parent=1 // pred_check
      _
    $region59: #{tpu_custom_call.1} parent=1 // pred_check_branch
      %113 = sbr.rel (0) target = $region61
    $region60: #{tpu_custom_call.1} parent=1 // pred_region
      %114 = dma.done [#allocation9], 1024
    $region61: #{tpu_custom_call.1} parent=1 // pred_fallthru
      _
    // Predicated region
    $region62: #{tpu_custom_call.1} parent=1 // pred_check
      _
    $region63: #{tpu_custom_call.1} parent=1 // pred_check_branch
      %116 = sbr.rel (0) target = $region65
    $region64: #{tpu_custom_call.1} parent=1 // pred_region
      %117 = dma.done [#allocation9], 1024
    $region65: #{tpu_custom_call.1} parent=1 // pred_fallthru
      _
    // Predicated region
    $region66: #{tpu_custom_call.1} parent=1 // pred_check
      _
    $region67: #{tpu_custom_call.1} parent=1 // pred_check_branch
      %119 = sbr.rel (0) target = $region69
    $region68: #{tpu_custom_call.1} parent=1 // pred_region
      %120 = dma.done [#allocation12], 1024
    $region69: #{tpu_custom_call.1} parent=1 // pred_fallthru
      _
    %v122 = vld [vmem:[#allocation2] sm:$0xf]
    %v123 = vld [vmem:[#allocation2 + $0x4] sm:$0xf]
    %v124 = vld [vmem:[#allocation5] sm:$0xf]
    %v125 = vld [vmem:[#allocation5 + $0x4] sm:$0xf]
    %v126 = vld [vmem:[#allocation5 + $0x8] sm:$0xf]
    %v127 = vld [vmem:[#allocation5 + $0xc] sm:$0xf]
    %v128 = vld [vmem:[%s2] sm:$0x1]
    %v130 = vlaneseq
    %v131 = vshrl.u32 %v130, 7
    %v132 = vsub.s32 0, %v131
    %v133 = vrot.slane %v128, %v132
    %v137 = vunpack.c.l.b16 %v122
    %v138 = vunpack.c.l.b16 %v123
    %v139 = vpack.c.b16 %v138, %v137
    %v144 = vunpack.c.l.b16 %v124
    %v145 = vunpack.c.l.b16 %v125
    %v146 = vunpack.c.l.b16 %v126
    %v147 = vunpack.c.l.b16 %v127
    %v148 = vpack.c.b16 %v145, %v144
    %v149 = vpack.c.b16 %v147, %v146
    %vm152 = vcmask 261120
    %v154 = vsel %vm152, %v139, 0
    %156 = vmatprep.subr.bf16.mxu0 0
    %157 = vmatpush1.bf16.msra.mxu0 %v148
    %158 = vmatprep.subr.bf16.mxu0 0
    %159 = vmatpush1.bf16.msra.mxu0 %v149
    %160 = vmatprep.subr.bf16.mxu0 0
    %161 = vmatpush1.bf16.msra.mxu0 0
    %162 = vmatprep.subr.bf16.mxu0 0
    %163 = vmatpush1.bf16.msra.mxu0 0
    %164 = vmatprep.subr.bf16.mxu0 0
    %165 = vmatpush1.bf16.msra.mxu0 0
    %166 = vmatprep.subr.bf16.mxu0 0
    %167 = vmatpush1.bf16.msra.mxu0 0
    %168 = vmatprep.subr.bf16.mxu0 0
    %169 = vmatpush1.bf16.msra.mxu0 0
    %170 = vmatprep.subr.bf16.mxu0 0
    %171 = vmatpush1.bf16.msra.mxu0 0
    %172 = vmatprep.subr.bf16.mxu0 0
    %173 = vmatpush1.bf16.msra.mxu0 0
    %174 = vmatprep.subr.bf16.mxu0 0
    %175 = vmatpush1.bf16.msra.mxu0 0
    %176 = vmatprep.subr.bf16.mxu0 0
    %177 = vmatpush1.bf16.msra.mxu0 0
    %178 = vmatprep.subr.bf16.mxu0 0
    %179 = vmatpush1.bf16.msra.mxu0 0
    %180 = vmatprep.subr.bf16.mxu0 0
    %181 = vmatpush1.bf16.msra.mxu0 0
    %182 = vmatprep.subr.bf16.mxu0 0
    %183 = vmatpush1.bf16.msra.mxu0 0
    %184 = vmatprep.subr.bf16.mxu0 0
    %185 = vmatpush1.bf16.msra.mxu0 0
    %186 = vmatprep.subr.bf16.mxu0 0
    %187 = vmatpush1.bf16.msra.mxu0 0
    %188 = vmatprep.mubr.bf16.mxu0 0
    %189 = vmatmul.mubr.bf16.gmra.mrb[0].mxu0 %v154
    %v190 = vpop.f32.mrb[0].mxu0
    %v191 = vadd.f32 %v133, %v190
    %v192 = vpop.f32.mrb[0].mxu0
    %v193 = vpop.f32.mrb[0].mxu0
    %v194 = vadd.f32 %v133, %v193
    %v195 = vpop.f32.mrb[0].mxu0
    %196 = vdwg.mxu0
    %v197 = vmax.f32 %v191, 0.0
    %v198 = vmax.f32 %v194, 0.0
    %v199 = vpack.c.bf16 %v198, %v197
    %v200 = vld [vmem:[#allocation7] sm:$0xf]
    %v201 = vld [vmem:[#allocation7 + $0x4] sm:$0xf]
    %v202 = vld [vmem:[#allocation7 + $0x8] sm:$0xf]
    %v203 = vld [vmem:[#allocation7 + $0xc] sm:$0xf]
    %v204 = vld [vmem:[#allocation7 + $0x10] sm:$0xf]
    %v205 = vld [vmem:[#allocation7 + $0x14] sm:$0xf]
    %v206 = vld [vmem:[#allocation7 + $0x18] sm:$0xf]
    %v207 = vld [vmem:[#allocation7 + $0x1c] sm:$0xf]
    %v208 = vld [vmem:[#allocation7 + $0x20] sm:$0xf]
    %v209 = vld [vmem:[#allocation7 + $0x24] sm:$0xf]
    %v210 = vld [vmem:[#allocation7 + $0x28] sm:$0xf]
    %v211 = vld [vmem:[#allocation7 + $0x2c] sm:$0xf]
    %v212 = vld [vmem:[#allocation7 + $0x30] sm:$0xf]
    %v213 = vld [vmem:[#allocation7 + $0x34] sm:$0xf]
    %v214 = vld [vmem:[#allocation7 + $0x38] sm:$0xf]
    %v215 = vld [vmem:[#allocation7 + $0x3c] sm:$0xf]
    %v216 = vld [vmem:[%s4] sm:$0x1]
    %v218 = vlaneseq
    %v219 = vshrl.u32 %v218, 7
    %v220 = vsub.s32 0, %v219
    %v221 = vrot.slane %v216, %v220
    %v239 = vunpack.c.l.b16 %v200
    %v240 = vunpack.c.l.b16 %v201
    %v241 = vunpack.c.l.b16 %v202
    %v242 = vunpack.c.l.b16 %v203
    %v243 = vunpack.c.l.b16 %v204
    %v244 = vunpack.c.l.b16 %v205
    %v245 = vunpack.c.l.b16 %v206
    %v246 = vunpack.c.l.b16 %v207
    %v247 = vunpack.c.l.b16 %v208
    %v248 = vunpack.c.l.b16 %v209
    %v249 = vunpack.c.l.b16 %v210
    %v250 = vunpack.c.l.b16 %v211
    %v251 = vunpack.c.l.b16 %v212
    %v252 = vunpack.c.l.b16 %v213
    %v253 = vunpack.c.l.b16 %v214
    %v254 = vunpack.c.l.b16 %v215
    %v255 = vpack.c.b16 %v240, %v239
    %v256 = vpack.c.b16 %v242, %v241
    %v257 = vpack.c.b16 %v244, %v243
    %v258 = vpack.c.b16 %v246, %v245
    %v259 = vpack.c.b16 %v248, %v247
    %v260 = vpack.c.b16 %v250, %v249
    %v261 = vpack.c.b16 %v252, %v251
    %v262 = vpack.c.b16 %v254, %v253
    %271 = vmatprep.subr.bf16.mxu0 0
    %272 = vmatpush1.bf16.msra.mxu0 %v255
    %273 = vmatprep.subr.bf16.mxu0 0
    %274 = vmatpush1.bf16.msra.mxu0 %v256
    %275 = vmatprep.subr.bf16.mxu0 0
    %276 = vmatpush1.bf16.msra.mxu0 %v257
    %277 = vmatprep.subr.bf16.mxu0 0
    %278 = vmatpush1.bf16.msra.mxu0 %v258
    %279 = vmatprep.subr.bf16.mxu0 0
    %280 = vmatpush1.bf16.msra.mxu0 %v259
    %281 = vmatprep.subr.bf16.mxu0 0
    %282 = vmatpush1.bf16.msra.mxu0 %v260
    %283 = vmatprep.subr.bf16.mxu0 0
    %284 = vmatpush1.bf16.msra.mxu0 %v261
    %285 = vmatprep.subr.bf16.mxu0 0
    %286 = vmatpush1.bf16.msra.mxu0 %v262
    %287 = vmatprep.subr.bf16.mxu0 0
    %288 = vmatpush1.bf16.msra.mxu0 0
    %289 = vmatprep.subr.bf16.mxu0 0
    %290 = vmatpush1.bf16.msra.mxu0 0
    %291 = vmatprep.subr.bf16.mxu0 0
    %292 = vmatpush1.bf16.msra.mxu0 0
    %293 = vmatprep.subr.bf16.mxu0 0
    %294 = vmatpush1.bf16.msra.mxu0 0
    %295 = vmatprep.subr.bf16.mxu0 0
    %296 = vmatpush1.bf16.msra.mxu0 0
    %297 = vmatprep.subr.bf16.mxu0 0
    %298 = vmatpush1.bf16.msra.mxu0 0
    %299 = vmatprep.subr.bf16.mxu0 0
    %300 = vmatpush1.bf16.msra.mxu0 0
    %301 = vmatprep.subr.bf16.mxu0 0
    %302 = vmatpush1.bf16.msra.mxu0 0
    %303 = vmatprep.mubr.bf16.mxu0 0
    %304 = vmatmul.mubr.bf16.gmra.mrb[0].mxu0 %v199
    %v305 = vpop.f32.mrb[0].mxu0
    %v306 = vadd.f32 %v221, %v305
    %v307 = vpop.f32.mrb[0].mxu0
    %v308 = vpop.f32.mrb[0].mxu0
    %v309 = vadd.f32 %v221, %v308
    %v310 = vpop.f32.mrb[0].mxu0
    %311 = vdwg.mxu0
    %v312 = vmax.f32 %v306, 0.0
    %v313 = vmax.f32 %v309, 0.0
    %v314 = vpack.c.bf16 %v313, %v312
    %v315 = vld [vmem:[#allocation8] sm:$0xf]
    %v316 = vld [vmem:[#allocation8 + $0x4] sm:$0xf]
    %v317 = vld [vmem:[#allocation8 + $0x8] sm:$0xf]
    %v318 = vld [vmem:[#allocation8 + $0xc] sm:$0xf]
    %v319 = vld [vmem:[#allocation8 + $0x10] sm:$0xf]
    %v320 = vld [vmem:[#allocation8 + $0x14] sm:$0xf]
    %v321 = vld [vmem:[#allocation8 + $0x18] sm:$0xf]
    %v322 = vld [vmem:[#allocation8 + $0x1c] sm:$0xf]
    %v323 = vld [vmem:[#allocation8 + $0x20] sm:$0xf]
    %v324 = vld [vmem:[#allocation8 + $0x24] sm:$0xf]
    %v325 = vld [vmem:[#allocation8 + $0x28] sm:$0xf]
    %v326 = vld [vmem:[#allocation8 + $0x2c] sm:$0xf]
    %v327 = vld [vmem:[#allocation8 + $0x30] sm:$0xf]
    %v328 = vld [vmem:[#allocation8 + $0x34] sm:$0xf]
    %v329 = vld [vmem:[#allocation8 + $0x38] sm:$0xf]
    %v330 = vld [vmem:[#allocation8 + $0x3c] sm:$0xf]
    %v331 = vld [vmem:[%s6] sm:$0x1]
    %v333 = vlaneseq
    %v334 = vshrl.u32 %v333, 7
    %v335 = vsub.s32 0, %v334
    %v336 = vrot.slane %v331, %v335
    %v354 = vunpack.c.l.b16 %v315
    %v355 = vunpack.c.l.b16 %v316
    %v356 = vunpack.c.l.b16 %v317
    %v357 = vunpack.c.l.b16 %v318
    %v358 = vunpack.c.l.b16 %v319
    %v359 = vunpack.c.l.b16 %v320
    %v360 = vunpack.c.l.b16 %v321
    %v361 = vunpack.c.l.b16 %v322
    %v362 = vunpack.c.l.b16 %v323
    %v363 = vunpack.c.l.b16 %v324
    %v364 = vunpack.c.l.b16 %v325
    %v365 = vunpack.c.l.b16 %v326
    %v366 = vunpack.c.l.b16 %v327
    %v367 = vunpack.c.l.b16 %v328
    %v368 = vunpack.c.l.b16 %v329
    %v369 = vunpack.c.l.b16 %v330
    %v370 = vpack.c.b16 %v355, %v354
    %v371 = vpack.c.b16 %v357, %v356
    %v372 = vpack.c.b16 %v359, %v358
    %v373 = vpack.c.b16 %v361, %v360
    %v374 = vpack.c.b16 %v363, %v362
    %v375 = vpack.c.b16 %v365, %v364
    %v376 = vpack.c.b16 %v367, %v366
    %v377 = vpack.c.b16 %v369, %v368
    %386 = vmatprep.subr.bf16.mxu0 0
    %387 = vmatpush1.bf16.msra.mxu0 %v370
    %388 = vmatprep.subr.bf16.mxu0 0
    %389 = vmatpush1.bf16.msra.mxu0 %v371
    %390 = vmatprep.subr.bf16.mxu0 0
    %391 = vmatpush1.bf16.msra.mxu0 %v372
    %392 = vmatprep.subr.bf16.mxu0 0
    %393 = vmatpush1.bf16.msra.mxu0 %v373
    %394 = vmatprep.subr.bf16.mxu0 0
    %395 = vmatpush1.bf16.msra.mxu0 %v374
    %396 = vmatprep.subr.bf16.mxu0 0
    %397 = vmatpush1.bf16.msra.mxu0 %v375
    %398 = vmatprep.subr.bf16.mxu0 0
    %399 = vmatpush1.bf16.msra.mxu0 %v376
    %400 = vmatprep.subr.bf16.mxu0 0
    %401 = vmatpush1.bf16.msra.mxu0 %v377
    %402 = vmatprep.subr.bf16.mxu0 0
    %403 = vmatpush1.bf16.msra.mxu0 0
    %404 = vmatprep.subr.bf16.mxu0 0
    %405 = vmatpush1.bf16.msra.mxu0 0
    %406 = vmatprep.subr.bf16.mxu0 0
    %407 = vmatpush1.bf16.msra.mxu0 0
    %408 = vmatprep.subr.bf16.mxu0 0
    %409 = vmatpush1.bf16.msra.mxu0 0
    %410 = vmatprep.subr.bf16.mxu0 0
    %411 = vmatpush1.bf16.msra.mxu0 0
    %412 = vmatprep.subr.bf16.mxu0 0
    %413 = vmatpush1.bf16.msra.mxu0 0
    %414 = vmatprep.subr.bf16.mxu0 0
    %415 = vmatpush1.bf16.msra.mxu0 0
    %416 = vmatprep.subr.bf16.mxu0 0
    %417 = vmatpush1.bf16.msra.mxu0 0
    %418 = vmatprep.mubr.bf16.mxu0 0
    %419 = vmatmul.mubr.bf16.gmra.mrb[0].mxu0 %v314
    %v420 = vpop.f32.mrb[0].mxu0
    %v421 = vadd.f32 %v336, %v420
    %v422 = vpop.f32.mrb[0].mxu0
    %v423 = vpop.f32.mrb[0].mxu0
    %v424 = vadd.f32 %v336, %v423
    %v425 = vpop.f32.mrb[0].mxu0
    %426 = vdwg.mxu0
    %v427 = vpack.c.bf16 %v424, %v421
    %v428 = vld [vmem:[#allocation10] sm:$0xf]
    %v429 = vld [vmem:[#allocation10 + $0x4] sm:$0xf]
    %v430 = vld [vmem:[#allocation10 + $0x8] sm:$0xf]
    %v431 = vld [vmem:[#allocation10 + $0xc] sm:$0xf]
    %v432 = vld [vmem:[#allocation10 + $0x10] sm:$0xf]
    %v433 = vld [vmem:[#allocation10 + $0x14] sm:$0xf]
    %v434 = vld [vmem:[#allocation10 + $0x18] sm:$0xf]
    %v435 = vld [vmem:[#allocation10 + $0x1c] sm:$0xf]
    %v436 = vld [vmem:[#allocation10 + $0x20] sm:$0xf]
    %v437 = vld [vmem:[#allocation10 + $0x24] sm:$0xf]
    %v438 = vld [vmem:[#allocation10 + $0x28] sm:$0xf]
    %v439 = vld [vmem:[#allocation10 + $0x2c] sm:$0xf]
    %v440 = vld [vmem:[#allocation10 + $0x30] sm:$0xf]
    %v441 = vld [vmem:[#allocation10 + $0x34] sm:$0xf]
    %v442 = vld [vmem:[#allocation10 + $0x38] sm:$0xf]
    %v443 = vld [vmem:[#allocation10 + $0x3c] sm:$0xf]
    %v444 = vld [vmem:[%s8] sm:$0x1]
    %v446 = vlaneseq
    %v447 = vshrl.u32 %v446, 7
    %v448 = vsub.s32 0, %v447
    %v449 = vrot.slane %v444, %v448
    %v467 = vunpack.c.l.b16 %v428
    %v468 = vunpack.c.l.b16 %v429
    %v469 = vunpack.c.l.b16 %v430
    %v470 = vunpack.c.l.b16 %v431
    %v471 = vunpack.c.l.b16 %v432
    %v472 = vunpack.c.l.b16 %v433
    %v473 = vunpack.c.l.b16 %v434
    %v474 = vunpack.c.l.b16 %v435
    %v475 = vunpack.c.l.b16 %v436
    %v476 = vunpack.c.l.b16 %v437
    %v477 = vunpack.c.l.b16 %v438
    %v478 = vunpack.c.l.b16 %v439
    %v479 = vunpack.c.l.b16 %v440
    %v480 = vunpack.c.l.b16 %v441
    %v481 = vunpack.c.l.b16 %v442
    %v482 = vunpack.c.l.b16 %v443
    %v483 = vpack.c.b16 %v468, %v467
    %v484 = vpack.c.b16 %v470, %v469
    %v485 = vpack.c.b16 %v472, %v471
    %v486 = vpack.c.b16 %v474, %v473
    %v487 = vpack.c.b16 %v476, %v475
    %v488 = vpack.c.b16 %v478, %v477
    %v489 = vpack.c.b16 %v480, %v479
    %v490 = vpack.c.b16 %v482, %v481
    %499 = vmatprep.subr.bf16.mxu0 0
    %500 = vmatpush1.bf16.msra.mxu0 %v483
    %501 = vmatprep.subr.bf16.mxu0 0
    %502 = vmatpush1.bf16.msra.mxu0 %v484
    %503 = vmatprep.subr.bf16.mxu0 0
    %504 = vmatpush1.bf16.msra.mxu0 %v485
    %505 = vmatprep.subr.bf16.mxu0 0
    %506 = vmatpush1.bf16.msra.mxu0 %v486
    %507 = vmatprep.subr.bf16.mxu0 0
    %508 = vmatpush1.bf16.msra.mxu0 %v487
    %509 = vmatprep.subr.bf16.mxu0 0
    %510 = vmatpush1.bf16.msra.mxu0 %v488
    %511 = vmatprep.subr.bf16.mxu0 0
    %512 = vmatpush1.bf16.msra.mxu0 %v489
    %513 = vmatprep.subr.bf16.mxu0 0
    %514 = vmatpush1.bf16.msra.mxu0 %v490
    %515 = vmatprep.subr.bf16.mxu0 0
    %516 = vmatpush1.bf16.msra.mxu0 0
    %517 = vmatprep.subr.bf16.mxu0 0
    %518 = vmatpush1.bf16.msra.mxu0 0
    %519 = vmatprep.subr.bf16.mxu0 0
    %520 = vmatpush1.bf16.msra.mxu0 0
    %521 = vmatprep.subr.bf16.mxu0 0
    %522 = vmatpush1.bf16.msra.mxu0 0
    %523 = vmatprep.subr.bf16.mxu0 0
    %524 = vmatpush1.bf16.msra.mxu0 0
    %525 = vmatprep.subr.bf16.mxu0 0
    %526 = vmatpush1.bf16.msra.mxu0 0
    %527 = vmatprep.subr.bf16.mxu0 0
    %528 = vmatpush1.bf16.msra.mxu0 0
    %529 = vmatprep.subr.bf16.mxu0 0
    %530 = vmatpush1.bf16.msra.mxu0 0
    %531 = vmatprep.mubr.bf16.mxu0 0
    %532 = vmatmul.mubr.bf16.gmra.mrb[0].mxu0 %v427
    %v533 = vpop.f32.mrb[0].mxu0
    %v534 = vadd.f32 %v449, %v533
    %v535 = vpop.f32.mrb[0].mxu0
    %v536 = vpop.f32.mrb[0].mxu0
    %v537 = vadd.f32 %v449, %v536
    %v538 = vpop.f32.mrb[0].mxu0
    %539 = vdwg.mxu0
    %v540 = vmax.f32 %v534, 0.0
    %v541 = vmax.f32 %v537, 0.0
    %v542 = vpack.c.bf16 %v541, %v540
    %v543 = vld [vmem:[#allocation11] sm:$0xf]
    %v544 = vld [vmem:[#allocation11 + $0x4] sm:$0xf]
    %v545 = vld [vmem:[#allocation11 + $0x8] sm:$0xf]
    %v546 = vld [vmem:[#allocation11 + $0xc] sm:$0xf]
    %v547 = vld [vmem:[#allocation11 + $0x10] sm:$0xf]
    %v548 = vld [vmem:[#allocation11 + $0x14] sm:$0xf]
    %v549 = vld [vmem:[#allocation11 + $0x18] sm:$0xf]
    %v550 = vld [vmem:[#allocation11 + $0x1c] sm:$0xf]
    %v551 = vld [vmem:[#allocation11 + $0x20] sm:$0xf]
    %v552 = vld [vmem:[#allocation11 + $0x24] sm:$0xf]
    %v553 = vld [vmem:[#allocation11 + $0x28] sm:$0xf]
    %v554 = vld [vmem:[#allocation11 + $0x2c] sm:$0xf]
    %v555 = vld [vmem:[#allocation11 + $0x30] sm:$0xf]
    %v556 = vld [vmem:[#allocation11 + $0x34] sm:$0xf]
    %v557 = vld [vmem:[#allocation11 + $0x38] sm:$0xf]
    %v558 = vld [vmem:[#allocation11 + $0x3c] sm:$0xf]
    %v559 = vld [vmem:[%s10] sm:$0x1]
    %v561 = vlaneseq
    %v562 = vshrl.u32 %v561, 7
    %v563 = vsub.s32 0, %v562
    %v564 = vrot.slane %v559, %v563
    %v582 = vunpack.c.l.b16 %v543
    %v583 = vunpack.c.l.b16 %v544
    %v584 = vunpack.c.l.b16 %v545
    %v585 = vunpack.c.l.b16 %v546
    %v586 = vunpack.c.l.b16 %v547
    %v587 = vunpack.c.l.b16 %v548
    %v588 = vunpack.c.l.b16 %v549
    %v589 = vunpack.c.l.b16 %v550
    %v590 = vunpack.c.l.b16 %v551
    %v591 = vunpack.c.l.b16 %v552
    %v592 = vunpack.c.l.b16 %v553
    %v593 = vunpack.c.l.b16 %v554
    %v594 = vunpack.c.l.b16 %v555
    %v595 = vunpack.c.l.b16 %v556
    %v596 = vunpack.c.l.b16 %v557
    %v597 = vunpack.c.l.b16 %v558
    %v598 = vpack.c.b16 %v583, %v582
    %v599 = vpack.c.b16 %v585, %v584
    %v600 = vpack.c.b16 %v587, %v586
    %v601 = vpack.c.b16 %v589, %v588
    %v602 = vpack.c.b16 %v591, %v590
    %v603 = vpack.c.b16 %v593, %v592
    %v604 = vpack.c.b16 %v595, %v594
    %v605 = vpack.c.b16 %v597, %v596
    %614 = vmatprep.subr.bf16.mxu0 0
    %615 = vmatpush1.bf16.msra.mxu0 %v598
    %616 = vmatprep.subr.bf16.mxu0 0
    %617 = vmatpush1.bf16.msra.mxu0 %v599
    %618 = vmatprep.subr.bf16.mxu0 0
    %619 = vmatpush1.bf16.msra.mxu0 %v600
    %620 = vmatprep.subr.bf16.mxu0 0
    %621 = vmatpush1.bf16.msra.mxu0 %v601
    %622 = vmatprep.subr.bf16.mxu0 0
    %623 = vmatpush1.bf16.msra.mxu0 %v602
    %624 = vmatprep.subr.bf16.mxu0 0
    %625 = vmatpush1.bf16.msra.mxu0 %v603
    %626 = vmatprep.subr.bf16.mxu0 0
    %627 = vmatpush1.bf16.msra.mxu0 %v604
    %628 = vmatprep.subr.bf16.mxu0 0
    %629 = vmatpush1.bf16.msra.mxu0 %v605
    %630 = vmatprep.subr.bf16.mxu0 0
    %631 = vmatpush1.bf16.msra.mxu0 0
    %632 = vmatprep.subr.bf16.mxu0 0
    %633 = vmatpush1.bf16.msra.mxu0 0
    %634 = vmatprep.subr.bf16.mxu0 0
    %635 = vmatpush1.bf16.msra.mxu0 0
    %636 = vmatprep.subr.bf16.mxu0 0
    %637 = vmatpush1.bf16.msra.mxu0 0
    %638 = vmatprep.subr.bf16.mxu0 0
    %639 = vmatpush1.bf16.msra.mxu0 0
    %640 = vmatprep.subr.bf16.mxu0 0
    %641 = vmatpush1.bf16.msra.mxu0 0
    %642 = vmatprep.subr.bf16.mxu0 0
    %643 = vmatpush1.bf16.msra.mxu0 0
    %644 = vmatprep.subr.bf16.mxu0 0
    %645 = vmatpush1.bf16.msra.mxu0 0
    %646 = vmatprep.mubr.bf16.mxu0 0
    %647 = vmatmul.mubr.bf16.gmra.mrb[0].mxu0 %v542
    %v648 = vpop.f32.mrb[0].mxu0
    %v649 = vadd.f32 %v564, %v648
    %v650 = vpop.f32.mrb[0].mxu0
    %v651 = vpop.f32.mrb[0].mxu0
    %v652 = vadd.f32 %v564, %v651
    %v653 = vpop.f32.mrb[0].mxu0
    %654 = vdwg.mxu0
    %655 = vst [vmem:[#allocation13] sm:$0xff] %v649
    %656 = vst [vmem:[#allocation13 + $0x8] sm:$0xff] %v652
    // Predicated region
    $region70: #{tpu_custom_call.1} parent=1 // pred_check
      _
    $region71: #{tpu_custom_call.1} parent=1 // pred_check_branch
      %658 = sbr.rel (0) target = $region73
    $region72: #{tpu_custom_call.1} parent=1 // pred_region
      %s660 = ssub.s32 256, 256
      %661 = vsyncadd [#allocation4], %s660
      %s662 = sshll.u32 [#allocation13], 4
      %s663 = int_to_ptr.vmem [resolvable:$true] %s662
      %668 = dma.vmem_to_hbm [thread:$0]  %s663, 256, %s11, [#allocation4], 128, 128, 8
    $region73: #{tpu_custom_call.1} parent=1 // pred_fallthru
      _
    // Predicated region
    $region74: #{tpu_custom_call.1} parent=1 // pred_check
      _
    $region75: #{tpu_custom_call.1} parent=1 // pred_check_branch
      %670 = sbr.rel (0) target = $region77
    $region76: #{tpu_custom_call.1} parent=1 // pred_region
      %671 = dma.done [#allocation4], 256
    $region77: #{tpu_custom_call.1} parent=1 // pred_fallthru
      _
    %672 = vsyncpa [#allocation3], 1
    %673 = vsyncpa [#allocation6], 1
    %674 = vsyncpa [#allocation9], 1
    %675 = vsyncpa [#allocation12], 1
    %676 = vsyncpa [#allocation4], 1

</llo_original>
